<compile_context>
chip_gen: v6e
topology: v6e:2x2x1
jax: 0.10.0
libtpu: 0.0.40
codegen_flags: <defaults>
</compile_context>

<pallas_src>
import functools

import jax
import jax.numpy as jnp
from jax.experimental import pallas as pl
from jax.experimental.pallas import tpu as pltpu


def _focal_loss_kernel(logits_ref, target_ref, out_ref, acc_ref, *,
                       gamma, n_valid, tiles_per_shard, tile_n,
                       needs_mask, slab_bf16):
    shard = pl.program_id(0)
    i = pl.program_id(1)

    # Per-shard (TILE_N, 1) accumulator lives across the tile axis.
    @pl.when(i == 0)
    def _():
        acc_ref[...] = jnp.zeros_like(acc_ref)

    tile_start = (shard * tiles_per_shard + i) * tile_n

    def compute():
        x = logits_ref[...]                                   # (TILE_N, C)
        if not slab_bf16:
            x = x.astype(jnp.float32)
        tn, c = x.shape
        tgt = target_ref[...]                                 # (TILE_N, 1) i32

        # Numerically stable softmax pieces — one max, one subtract, one exp.
        m = jnp.max(x, axis=-1, keepdims=True)                # (TILE_N, 1)
        z = x - m                                             # slab
        e = jnp.exp(z)                                        # slab (bf16 EUP ok)

        col = jax.lax.broadcasted_iota(jnp.int32, (tn, c), 1)
        sel = col == tgt                                      # (TILE_N, C) bool

        if slab_bf16:
            # sum of exps accumulated in f32; z_t gather is exact in bf16
            # (exactly one nonzero per row), cast afterwards.
            sumexp = jnp.sum(e.astype(jnp.float32), axis=-1, keepdims=True)
            z_t = jnp.sum(jnp.where(sel, z, jnp.zeros_like(z)),
                          axis=-1, keepdims=True).astype(jnp.float32)
        else:
            sumexp = jnp.sum(e, axis=-1, keepdims=True)       # (TILE_N, 1)
            z_t = jnp.sum(jnp.where(sel, z, 0.0),
                          axis=-1, keepdims=True)             # (TILE_N, 1)

        lse = jnp.log(sumexp)                                 # (TILE_N, 1) f32
        ce = lse - z_t                                        # cross entropy
        pt = jnp.exp(z_t - lse)                               # row-wide exp only

        one_minus_pt = jnp.maximum(1.0 - pt, 0.0)             # guard fp rounding
        g = float(gamma)
        if g == 2.0:
            mod = one_minus_pt * one_minus_pt                 # VPU only, no pow
        elif g == int(g) and g >= 0.0:
            mod = jax.lax.integer_pow(one_minus_pt, int(g))
        else:
            mod = one_minus_pt ** g

        focal = mod * ce                                      # (TILE_N, 1)

        if needs_mask:
            row = jax.lax.broadcasted_iota(jnp.int32, (tn, 1), 0) + tile_start
            focal = jnp.where(row < n_valid, focal, 0.0)

        acc_ref[...] += focal

    if needs_mask:
        # Skip fully padded tiles (can occur with the 2-shard v7x grid).
        @pl.when(tile_start < n_valid)
        def _():
            compute()
    else:
        compute()

    @pl.when(i == tiles_per_shard - 1)
    def _():
        out_ref[...] = jnp.sum(acc_ref[...]).reshape(1, 1, 1)


def _tpu_generation():
    kind = ""
    try:
        kind = (jax.devices()[0].device_kind or "").lower()
    except Exception:
        pass
    if "v7" in kind:
        return "v7x"
    if "v6" in kind:
        return "v6e"
    if "v5" in kind:
        return "v5"
    if "v4" in kind:
        return "v4"
    return "unknown"


# gen -> (vmem_limit_bytes, tensorcores_per_chip, tile_row_cap, vmem_budget_bytes)
_GEN_CONFIG = {
    "v7x":     (48 * 2**20, 2, 1024, 20 * 2**20),   # 64 MiB VMEM / TC
    "v6e":     (96 * 2**20, 1, 2048, 40 * 2**20),   # 128 MiB VMEM
    "v5":      (64 * 2**20, 1, 2048, 28 * 2**20),   # 128 MiB VMEM (v5e/v5p)
    "v4":      (None,       1, 1024,  8 * 2**20),
    "unknown": (None,       1, 1024,  8 * 2**20),
}


def _pick_tile_rows(n, c, in_itemsize, tile_cap, budget_bytes):
    padded_rows = -(-n // 8) * 8
    # Per row: double-buffered logits block, ~4 f32 slab temporaries,
    # lane-padded (128 lanes) int32 target double-buffer + f32 accumulator.
    bytes_per_row = c * (2 * in_itemsize + 16) + 1536
    tile_n = budget_bytes // bytes_per_row
    tile_n = max(8, min(int(tile_n) // 8 * 8, tile_cap, padded_rows))
    return tile_n


def focal_loss(logits, target, gamma=2.0, weight=None, _tile_rows=None):
    """logits: (N, C) float, target: (N,) int — returns scalar focal loss."""
    if weight is not None:
        # TODO(synk): per-class `weight` rescaling (weight=None case implemented).
        raise NotImplementedError("per-class weight not implemented")

    n, c = logits.shape
    target2d = target.astype(jnp.int32).reshape(n, 1)

    gen = _tpu_generation()
    vmem_limit, num_cores, tile_cap, budget = _GEN_CONFIG[gen]
    slab_bf16 = (logits.dtype == jnp.bfloat16) and gen in ("v6e", "v7x")

    in_itemsize = jnp.dtype(logits.dtype).itemsize
    if _tile_rows is None:
        tile_n = _pick_tile_rows(n, c, in_itemsize, tile_cap, budget)
    else:
        tile_n = max(8, int(_tile_rows) // 8 * 8)

    num_tiles = pl.cdiv(n, tile_n)
    # One shard per TensorCore; single-TC chips (v4/v5e/v6e) use one shard so
    # no dead padded tiles / serialized outer loop are introduced.
    num_shards = num_cores if num_tiles >= num_cores else 1
    tiles_per_shard = pl.cdiv(num_tiles, num_shards)
    n_padded = num_shards * tiles_per_shard * tile_n

    if n_padded != n:
        logits = jnp.pad(logits, ((0, n_padded - n), (0, 0)))
        target2d = jnp.pad(target2d, ((0, n_padded - n), (0, 0)))

    kernel = functools.partial(
        _focal_loss_kernel, gamma=float(gamma), n_valid=n,
        tiles_per_shard=tiles_per_shard, tile_n=tile_n,
        needs_mask=(n_padded != n), slab_bf16=slab_bf16)

    partials = pl.pallas_call(
        kernel,
        out_shape=jax.ShapeDtypeStruct((num_shards, 1, 1), jnp.float32),
        grid_spec=pltpu.PrefetchScalarGridSpec(
            num_scalar_prefetch=0,
            grid=(num_shards, tiles_per_shard),
            in_specs=[
                pl.BlockSpec((tile_n, c),
                             lambda s, i: (s * tiles_per_shard + i, 0)),
                pl.BlockSpec((tile_n, 1),
                             lambda s, i: (s * tiles_per_shard + i, 0)),
            ],
            out_specs=pl.BlockSpec((1, 1, 1), lambda s, i: (s, 0, 0)),
            scratch_shapes=[pltpu.VMEM((tile_n, 1), jnp.float32)],
        ),
        compiler_params=pltpu.CompilerParams(
            dimension_semantics=("parallel", "arbitrary"),
            vmem_limit_bytes=vmem_limit,
        ),
    )(logits, target2d)

    # cross-shard combine + mean over the true N (one tiny XLA op)
    return jnp.sum(partials) / n


def _focal_loss_ref(logits, target, gamma=2.0):
    logp = jax.nn.log_softmax(logits.astype(jnp.float32), axis=-1)
    ce = -jnp.take_along_axis(logp, target.astype(jnp.int32)[:, None], axis=-1)[:, 0]
    pt = jnp.exp(-ce)
    return jnp.mean((1.0 - pt) ** gamma * ce)


if __name__ == "__main__":
    key = jax.random.PRNGKey(0)
    k1, k2, k3, k4, k5, k6, k7, k8 = jax.random.split(key, 8)

    # small case: 8 samples, 16 classes (single tile, single shard)
    N, C = 8, 16
    logits = jax.random.normal(k1, (N, C), dtype=jnp.float32)
    target = jax.random.randint(k2, (N,), 0, C, dtype=jnp.int32)
    loss = jax.block_until_ready(focal_loss(logits, target, gamma=2.0))
    ref = _focal_loss_ref(logits, target, gamma=2.0)
    assert jnp.allclose(loss, ref, atol=1e-5, rtol=1e-5), (loss, ref)

    # ragged case exercising multi-tile accumulation, sharding and row masking
    N2, C2 = 37, 24
    logits2 = jax.random.normal(k3, (N2, C2), dtype=jnp.float32)
    target2 = jax.random.randint(k4, (N2,), 0, C2, dtype=jnp.int32)
    loss2 = jax.block_until_ready(
        focal_loss(logits2, target2, gamma=2.0, _tile_rows=8))
    ref2 = _focal_loss_ref(logits2, target2, gamma=2.0)
    assert jnp.allclose(loss2, ref2, atol=1e-5, rtol=1e-5), (loss2, ref2)

    # auto tile sizing + padded-row masking at a moderately larger shape
    N3, C3 = 300, 128
    logits3 = jax.random.normal(k5, (N3, C3), dtype=jnp.float32)
    target3 = jax.random.randint(k6, (N3,), 0, C3, dtype=jnp.int32)
    loss3 = jax.block_until_ready(focal_loss(logits3, target3, gamma=2.0))
    ref3 = _focal_loss_ref(logits3, target3, gamma=2.0)
    assert jnp.allclose(loss3, ref3, atol=1e-5, rtol=1e-4), (loss3, ref3)

    # bf16 inputs (bf16 slab path on v6e/v7x, f32 slab elsewhere)
    N4, C4 = 64, 32
    logits4 = jax.random.normal(k7, (N4, C4), dtype=jnp.float32).astype(jnp.bfloat16)
    target4 = jax.random.randint(k8, (N4,), 0, C4, dtype=jnp.int32)
    loss4 = jax.block_until_ready(focal_loss(logits4, target4, gamma=2.0))
    ref4 = _focal_loss_ref(logits4, target4, gamma=2.0)
    assert jnp.allclose(loss4, ref4, atol=5e-2, rtol=1e-1), (loss4, ref4)

    print("KERNEL_OK")
</pallas_src>

<mosaic_0001>
module attributes {stable_mosaic.version = 11 : i64} {
  func.func @_focal_loss_kernel(%arg0: i32, %arg1: i32, %arg2: memref<8x16xf32, #tpu.memory_space<vmem>>, %arg3: memref<8x1xi32, #tpu.memory_space<vmem>>, %arg4: memref<1x1x1xf32, #tpu.memory_space<vmem>>, %arg5: memref<8x1xf32, #tpu.memory_space<vmem>>) attributes {dimension_semantics = [#tpu.dimension_semantics<parallel>, #tpu.dimension_semantics<arbitrary>], iteration_bounds = array<i64: 1, 1>, scalar_prefetch = 0 : i64, scratch_operands = 1 : i64, tpu.core_type = #tpu.core_type<tc>, window_params = [{transform_indices = @transform_0, window_bounds = array<i64: 8, 16>}, {transform_indices = @transform_1, window_bounds = array<i64: 8, 1>}, {transform_indices = @transform_2, window_bounds = array<i64: 1, 1, 1>}]} {
    %c0_i32 = arith.constant 0 : i32
    %0 = arith.cmpi eq, %arg1, %c0_i32 : i32
    %1 = arith.extui %0 : i1 to i32
    %c0_i32_0 = arith.constant 0 : i32
    %2 = arith.cmpi ne, %1, %c0_i32_0 : i32
    scf.if %2 {
      %cst_15 = arith.constant 0.000000e+00 : f32
      %35 = vector.broadcast %cst_15 : f32 to vector<8x1xf32>
      %c0_16 = arith.constant 0 : index
      %c0_17 = arith.constant 0 : index
      %36 = vector.load %arg5[%c0_16, %c0_17] : memref<8x1xf32, #tpu.memory_space<vmem>>, vector<8x1xf32>
      tpu.vector_store %arg5[%c0_16, %c0_17], %35 {strides = array<i32>} : memref<8x1xf32, #tpu.memory_space<vmem>>, vector<8x1xf32>,
    } else {
    }
    %c0 = arith.constant 0 : index
    %c0_1 = arith.constant 0 : index
    %3 = vector.load %arg2[%c0, %c0_1] : memref<8x16xf32, #tpu.memory_space<vmem>>, vector<8x16xf32>
    %c0_2 = arith.constant 0 : index
    %c0_3 = arith.constant 0 : index
    %4 = vector.load %arg3[%c0_2, %c0_3] : memref<8x1xi32, #tpu.memory_space<vmem>>, vector<8x1xi32>
    %cst = arith.constant dense<0xFF800000> : vector<8xf32>
    %5 = vector.multi_reduction <maximumf>, %3, %cst [1] : vector<8x16xf32> to vector<8xf32>
    %6 = vector.shape_cast %5 : vector<8xf32> to vector<8x1xf32>
    %7 = vector.broadcast %6 : vector<8x1xf32> to vector<8x16xf32>
    %8 = arith.subf %3, %7 : vector<8x16xf32>
    %9 = math.exp %8 : vector<8x16xf32>
    %10 = tpu.iota {dimensions = array<i32: 1>} : vector<8x16xi32>
    %11 = vector.broadcast %4 : vector<8x1xi32> to vector<8x16xi32>
    %12 = arith.cmpi eq, %10, %11 : vector<8x16xi32>
    %cst_4 = arith.constant dense<0.000000e+00> : vector<8xf32>
    %13 = vector.multi_reduction <add>, %9, %cst_4 [1] : vector<8x16xf32> to vector<8xf32>
    %14 = vector.shape_cast %13 : vector<8xf32> to vector<8x1xf32>
    %cst_5 = arith.constant 0.000000e+00 : f32
    %15 = vector.broadcast %cst_5 : f32 to vector<8x16xf32>
    %16 = arith.select %12, %8, %15 : vector<8x16xi1>, vector<8x16xf32>
    %cst_6 = arith.constant dense<0.000000e+00> : vector<8xf32>
    %17 = vector.multi_reduction <add>, %16, %cst_6 [1] : vector<8x16xf32> to vector<8xf32>
    %18 = vector.shape_cast %17 : vector<8xf32> to vector<8x1xf32>
    %19 = math.log %14 : vector<8x1xf32>
    %20 = arith.subf %19, %18 : vector<8x1xf32>
    %21 = arith.subf %18, %19 : vector<8x1xf32>
    %22 = math.exp %21 : vector<8x1xf32>
    %cst_7 = arith.constant 1.000000e+00 : f32
    %23 = vector.broadcast %cst_7 : f32 to vector<8x1xf32>
    %24 = arith.subf %23, %22 : vector<8x1xf32>
    %cst_8 = arith.constant 0.000000e+00 : f32
    %25 = vector.broadcast %cst_8 : f32 to vector<8x1xf32>
    %26 = arith.maximumf %24, %25 : vector<8x1xf32>
    %27 = arith.mulf %26, %26 : vector<8x1xf32>
    %28 = arith.mulf %27, %20 : vector<8x1xf32>
    %c0_9 = arith.constant 0 : index
    %c0_10 = arith.constant 0 : index
    %29 = vector.load %arg5[%c0_9, %c0_10] : memref<8x1xf32, #tpu.memory_space<vmem>>, vector<8x1xf32>
    %30 = arith.addf %29, %28 : vector<8x1xf32>
    %c0_11 = arith.constant 0 : index
    %c0_12 = arith.constant 0 : index
    %31 = vector.load %arg5[%c0_11, %c0_12] : memref<8x1xf32, #tpu.memory_space<vmem>>, vector<8x1xf32>
    tpu.vector_store %arg5[%c0_11, %c0_12], %30 {strides = array<i32>} : memref<8x1xf32, #tpu.memory_space<vmem>>, vector<8x1xf32>,
    %c0_i32_13 = arith.constant 0 : i32
    %32 = arith.cmpi eq, %arg1, %c0_i32_13 : i32
    %33 = arith.extui %32 : i1 to i32
    %c0_i32_14 = arith.constant 0 : i32
    %34 = arith.cmpi ne, %33, %c0_i32_14 : i32
    scf.if %34 {
      %c0_15 = arith.constant 0 : index
      %c0_16 = arith.constant 0 : index
      %35 = vector.load %arg5[%c0_15, %c0_16] : memref<8x1xf32, #tpu.memory_space<vmem>>, vector<8x1xf32>
      %36 = vector.shape_cast %35 : vector<8x1xf32> to vector<1x8x1xf32>
      %cst_17 = arith.constant dense<0.000000e+00> : vector<1xf32>
      %37 = vector.multi_reduction <add>, %36, %cst_17 [1, 2] : vector<1x8x1xf32> to vector<1xf32>
      %38 = vector.shape_cast %37 : vector<1xf32> to vector<1x1x1xf32>
      %39 = vector.extract %38[0, 0, 0] : f32 from vector<1x1x1xf32>
      %40 = vector.broadcast %39 : f32 to vector<1x1x1xf32>
      %c0_18 = arith.constant 0 : index
      %c0_19 = arith.constant 0 : index
      %c0_20 = arith.constant 0 : index
      %41 = vector.load %arg4[%c0_18, %c0_19, %c0_20] : memref<1x1x1xf32, #tpu.memory_space<vmem>>, vector<1x1x1xf32>
      tpu.vector_store %arg4[%c0_18, %c0_19, %c0_20], %40 {strides = array<i32>} : memref<1x1x1xf32, #tpu.memory_space<vmem>>, vector<1x1x1xf32>,
    } else {
    }
    return
  }
  func.func @transform_0(%arg0: i32, %arg1: i32) -> (i32, i32) {
    %c1_i32 = arith.constant 1 : i32
    %0 = arith.muli %arg0, %c1_i32 : i32
    %1 = arith.addi %0, %arg1 : i32
    %c0_i32 = arith.constant 0 : i32
    %c0_i32_0 = arith.constant 0 : i32
    return %1, %c0_i32 : i32, i32
  }
  func.func @transform_1(%arg0: i32, %arg1: i32) -> (i32, i32) {
    %c1_i32 = arith.constant 1 : i32
    %0 = arith.muli %arg0, %c1_i32 : i32
    %1 = arith.addi %0, %arg1 : i32
    %c0_i32 = arith.constant 0 : i32
    %c0_i32_0 = arith.constant 0 : i32
    return %1, %c0_i32 : i32, i32
  }
  func.func @transform_2(%arg0: i32, %arg1: i32) -> (i32, i32, i32) {
    %c0_i32 = arith.constant 0 : i32
    %c0_i32_0 = arith.constant 0 : i32
    %c0_i32_1 = arith.constant 0 : i32
    return %arg0, %c0_i32, %c0_i32_0 : i32, i32, i32
  }
}

</mosaic_0001>

<llo_original>
// kernel: tpu_custom_call.1
$region0: #{tpu_custom_call.1}
  #allocation0 [shape = 'u32[]', space=smem, size = 0x4, offset = 0x4, fixed_abs, tag = 'smem constant byte address 0x4 - core index']
  #allocation1 [shape = 'u32[144,128]{1,0:T(1,128)}', space=vmem, size = 0x12000, scoped, tag = 'internal scratch']
  #allocation2 [shape = 'f32[8,1]{1,0:T(8,128)}', space=vmem, size = 0x1000, scoped, tag = 'scratch operand']
  %s0 = inlined_call_operand.vmem [shape: f32[8,16], index: 0, kind: input, shape index: {}]
  %s1 = inlined_call_operand.vmem [shape: s32[8,1], index: 1, kind: input, shape index: {}]
  %s2 = inlined_call_operand.hbm [shape: f32[1,1,1], index: 2, kind: output, shape index: {}]
  %s3 = sld [smem:[#allocation0]]
  $region26: #{tpu_custom_call.1} parent=0
    _
  %s5 = ssub.s32 1, %s3
  %s6 = scalar_select 0, %s5, %s3
  $region1: #{tpu_custom_call.1} parent=0
    #allocation3 [shape = 'u8[512]{0}', space=vmem, size = 0x400, scoped, tag = 'output window, operand 0, single buffered']
    #allocation4 [shape = 's32[1]{0}', space=sflag, size = 0x4, scoped, tag = 'scoped memory for tpu_custom_call.1']
    %7 = vsyncpa [#allocation4], 0
    // Predicated region
    $region2: #{tpu_custom_call.1} parent=1 // pred_check
      _
    $region3: #{tpu_custom_call.1} parent=1 // pred_check_branch
      %9 = sbr.rel (0) target = $region5
    $region4: #{tpu_custom_call.1} parent=1 // pred_region
      %s10 = sadd.s32 0, 0
      %p11 = scmp.lt.s32.totalorder %s10, 0
      %s12 = scalar_select %p11, %s10, 0
      %s13 = smul.addr %s12, 8
      %s14 = scalar_lea.vmem %s0, %s13
      %s15 = sadd.s32 0, 0
    $region5: #{tpu_custom_call.1} parent=1 // pred_fallthru
      _
    // Predicated region
    $region6: #{tpu_custom_call.1} parent=1 // pred_check
      _
    $region7: #{tpu_custom_call.1} parent=1 // pred_check_branch
      %17 = sbr.rel (0) target = $region9
    $region8: #{tpu_custom_call.1} parent=1 // pred_region
      %s18 = sadd.s32 0, 0
      %p19 = scmp.lt.s32.totalorder %s18, 0
      %s20 = scalar_select %p19, %s18, 0
      %s21 = smul.addr %s20, 8
      %s22 = scalar_lea.vmem %s1, %s21
      %s23 = sadd.s32 0, 0
    $region9: #{tpu_custom_call.1} parent=1 // pred_fallthru
      _
    %s24 = sadd.s32 0, 0
    %p25 = scmp.lt.s32.totalorder %s24, 0
    %s26 = scalar_select %p25, %s24, 0
    %s27 = smul.addr %s26, 8
    %s28 = scalar_lea.vmem %s0, %s27
    %s29 = sadd.s32 0, 0
    %p30 = scmp.lt.s32.totalorder %s29, 0
    %s31 = scalar_select %p30, %s29, 0
    %s32 = smul.addr %s31, 8
    %s33 = scalar_lea.vmem %s1, %s32
    %s34 = sadd.s32 0, 0
    %p35 = scmp.lt.s32.totalorder %s34, 0
    %s36 = scalar_select %p35, %s34, 0
    %s37 = smul.addr %s36, 8
    %s38 = scalar_lea.vmem %s0, %s37
    %s39 = sadd.s32 0, 0
    %s40 = sadd.s32 0, 0
    %p41 = scmp.lt.s32.totalorder %s40, 0
    %s42 = scalar_select %p41, %s40, 0
    %s43 = smul.addr %s42, 8
    %s44 = scalar_lea.vmem %s1, %s43
    %s45 = sadd.s32 0, 0
    %p46 = scmp.eq.s32.totalorder 0, 0
    // Predicated region
    $region10: #{tpu_custom_call.1} parent=1 // pred_check
      %p47 = pneg %p46
    $region11: #{tpu_custom_call.1} parent=1 // pred_check_branch
      %49 = sbr.rel (%p47) target = $region13
    $region12: #{tpu_custom_call.1} parent=1 // pred_region
      %vm50 = vcmask 7168
      %51 = vst.msk [vmem:[#allocation2] sm:$0xff] %vm50, 0.0
    $region13: #{tpu_custom_call.1} parent=1 // pred_fallthru
      _
    %v52 = vld [vmem:[%s38] sm:$0xff]
    %v53 = vld [vmem:[%s44] sm:$0xff]
    %vm54 = vcmask 130048
    %v55 = vsel %vm54, %v52, -inf
    %56 = vmax.xlane.f32.xlu0 %v55
    %v57 = vpop.xlane.xlu0 %56
    %v58 = vsub.f32 %v52, %v57
    %v59 = vmul.f32 %v58, 1.442695
    %v60 = vpow.pop %v59
    %v61 = vlaneseq
    %v62 = vand.u32 %v61, 127
    %63 = vset.pattern.permute.xlu0 0
    %64 = vperm.xlu0 %63, %v53
    %v65 = vpop.permute.xlu0 %64
    %vm66 = vcmp.eq.s32.totalorder %v62, %v65
    %v67 = vsel %vm54, %v60, 0.0
    %68 = vadd.xlane.f32.xlu0 %v67
    %v69 = vpop.xlane.xlu0 %68
    %v70 = vsel %vm66, %v58, 0.0
    %v71 = vsel %vm54, %v70, 0.0
    %72 = vadd.xlane.f32.xlu0 %v71
    %v73 = vpop.xlane.xlu0 %72
    %v74 = vlog2.pop %v69
    %v75 = vmul.f32 %v74, 0.6931472
    %v76 = vsub.f32 %v75, %v73
    %v77 = vsub.f32 %v73, %v75
    %v78 = vmul.f32 %v77, 1.442695
    %v79 = vpow.pop %v78
    %v80 = vsub.f32 1.0, %v79
    %v81 = vmax.f32 %v80, 0.0
    %v82 = vmul.f32 %v81, %v81
    %v83 = vmul.f32 %v82, %v76
    %v84 = vld [vmem:[#allocation2] sm:$0xff]
    %v85 = vadd.f32 %v84, %v83
    %vm86 = vcmask 7168
    %87 = vst.msk [vmem:[#allocation2] sm:$0xff] %vm86, %v85
    // Predicated region
    $region14: #{tpu_custom_call.1} parent=1 // pred_check
      %p88 = pneg %p46
    $region15: #{tpu_custom_call.1} parent=1 // pred_check_branch
      %90 = sbr.rel (%p88) target = $region17
    $region16: #{tpu_custom_call.1} parent=1 // pred_region
      %v91 = vld [vmem:[#allocation2] sm:$0xff]
      %v92 = vsel %vm86, %v91, 0.0
      %93 = vadd.xlane.f32.xlu0 %v92
      %v94 = vpop.xlane.xlu0 %93
      %v95 = vrot.slane %v94, 4
      %v96 = vadd.f32 %v94, %v95
      %v97 = vrot.slane %v96, 2
      %v98 = vadd.f32 %v96, %v97
      %v99 = vrot.slane %v98, 1
      %v100 = vadd.f32 %v98, %v99
      %s101 = vtos %v100
      %v102 = vstv %s101
      %vm103 = vcmask 0
      %104 = vst.msk [vmem:[#allocation3] sm:$0x1] %vm103, %v102
    $region17: #{tpu_custom_call.1} parent=1 // pred_fallthru
      _
    // Predicated region
    $region18: #{tpu_custom_call.1} parent=1 // pred_check
      _
    $region19: #{tpu_custom_call.1} parent=1 // pred_check_branch
      %106 = sbr.rel (0) target = $region21
    $region20: #{tpu_custom_call.1} parent=1 // pred_region
      %s108 = ssub.s32 16, 16
      %109 = vsyncadd [#allocation4], %s108
      %s111 = sshll.u32 [#allocation3], 4
      %s112 = int_to_ptr.vmem [resolvable:$true] %s111
      %114 = dma.vmem_to_hbm [thread:$0]  %s112, 16, %s2, [#allocation4]
    $region21: #{tpu_custom_call.1} parent=1 // pred_fallthru
      _
    // Predicated region
    $region22: #{tpu_custom_call.1} parent=1 // pred_check
      _
    $region23: #{tpu_custom_call.1} parent=1 // pred_check_branch
      %116 = sbr.rel (0) target = $region25
    $region24: #{tpu_custom_call.1} parent=1 // pred_region
      %117 = dma.done [#allocation4], 16
    $region25: #{tpu_custom_call.1} parent=1 // pred_fallthru
      _
    %118 = vsyncpa [#allocation4], 1

</llo_original>
